<compile_context>
chip_gen: v5e
topology: v5e:2x2
jax: 0.10.0
libtpu: 0.0.40
codegen_flags: <defaults>
</compile_context>

<pallas_src>
import math
import functools

import jax
import jax.numpy as jnp
from jax import lax
from jax.experimental import pallas as pl
from jax.experimental.pallas import tpu as pltpu


# ----------------------------------------------------------------------------
# Single-step cell (matches BasicRNNCell.forward exactly)
# ----------------------------------------------------------------------------
def _rnn_cell_kernel(x_ref, h_ref, wx_ref, wh_ref, b_ref, out_ref, *, nonlinearity):
    # x_ref:  (B, In)   VMEM
    # h_ref:  (B, H)    VMEM
    # wx_ref: (In, H)   VMEM  == x2h.weight.T
    # wh_ref: (H, H)    VMEM  == h2h.weight.T
    # b_ref:  (1, H)    VMEM  == bx + bh (pre-summed), f32
    # out_ref:(B, H)    VMEM
    wdtype = wx_ref.dtype
    x2h = jnp.dot(x_ref[...].astype(wdtype), wx_ref[...],
                  preferred_element_type=jnp.float32)
    h2h = jnp.dot(h_ref[...].astype(wdtype), wh_ref[...],
                  preferred_element_type=jnp.float32)
    pre = x2h + h2h + b_ref[...].astype(jnp.float32)
    act = jnp.tanh(pre) if nonlinearity == "tanh" else jnp.maximum(pre, 0.0)
    out_ref[...] = act.astype(out_ref.dtype)


def basic_rnn_cell(x, hx, wx_t, wh_t, b_fused, *, nonlinearity="tanh"):
    """One BasicRNNCell step.

    x:       (B, input_size)
    hx:      (B, hidden_size) or None (-> zeros, as in the PyTorch forward)
    wx_t:    (input_size, hidden_size)   == x2h.weight.T
    wh_t:    (hidden_size, hidden_size)  == h2h.weight.T
    b_fused: (1, hidden_size)            == x2h.bias + h2h.bias  (f32)
    """
    B = x.shape[0]
    H = wh_t.shape[1]
    if hx is None:
        hx = jnp.zeros((B, H), x.dtype)
    kernel = functools.partial(_rnn_cell_kernel, nonlinearity=nonlinearity)
    # Single tile, no grid: whole arrays resident in VMEM, no pipelining overhead.
    return pl.pallas_call(
        kernel,
        out_shape=jax.ShapeDtypeStruct((B, H), x.dtype),
        in_specs=[pl.BlockSpec(memory_space=pltpu.MemorySpace.VMEM)] * 5,
        out_specs=pl.BlockSpec(memory_space=pltpu.MemorySpace.VMEM),
    )(x, hx, wx_t, wh_t, b_fused)


# ----------------------------------------------------------------------------
# Full-sequence kernel: hoisted input projection + in-kernel recurrence loop.
# ----------------------------------------------------------------------------
def _rnn_seq_kernel(x_ref, wx_ref, wh_ref, b_ref, h0_ref, out_ref, x2h_ref,
                    *, nonlinearity, seq_len):
    # grid = (B // Bb,), 'parallel' over batch blocks (v7x second TC; no-op v5e/v6e)
    # x_ref:   (T, Bb, In)   VMEM block of xs for this batch block
    # wx_ref:  (In, Hp)      VMEM, constant index_map (DMA'd once)
    # wh_ref:  (Hp, Hp)      VMEM, constant index_map
    # b_ref:   (1, Hp)       VMEM, f32
    # h0_ref:  (Bb, Hp)      VMEM
    # out_ref: (T, Bb, Hp)   VMEM block
    # x2h_ref: (T, Bb, Hp)   VMEM f32 scratch (hoisted input projection)
    T = seq_len
    Bb = x_ref.shape[1]
    In = x_ref.shape[2]
    Hp = wh_ref.shape[1]
    wdtype = wx_ref.dtype

    # ---- Hoisted input projection: ONE (T*Bb, In) x (In, Hp) MXU pass. ----
    # (Collapsing (T, Bb) -> T*Bb only merges leading dims; layout-preserving
    # when Bb is a multiple of 8 sublanes.)
    x_flat = x_ref[...].reshape(T * Bb, In).astype(wdtype)
    x2h = jnp.dot(x_flat, wx_ref[...], preferred_element_type=jnp.float32)
    x2h = x2h + b_ref[...].astype(jnp.float32)          # bias folded in once
    x2h_ref[...] = x2h.reshape(T, Bb, Hp)

    # ---- Serial recurrence: only the (Bb,Hp)x(Hp,Hp) dot + tanh per step. ----
    def step(t, h):
        h2h = jnp.dot(h.astype(wdtype), wh_ref[...],
                      preferred_element_type=jnp.float32)
        pre = x2h_ref[t] + h2h
        if nonlinearity == "tanh":
            h_new = jnp.tanh(pre)
        else:  # 'relu'
            h_new = jnp.maximum(pre, 0.0)
        out_ref[t] = h_new.astype(out_ref.dtype)
        return h_new                                     # f32 carry

    # unroll=True: full unroll at small T gives the LLO scheduler visibility.
    lax.fori_loop(0, T, step, h0_ref[...].astype(jnp.float32), unroll=True)


def basic_rnn_sequence(xs, h0, wx_t, wh_t, b_fused, *, nonlinearity="tanh",
                       batch_block=None):
    """Run the cell over a whole sequence in a single pallas_call.

    xs:  (T, B, input_size)
    h0:  (B, hidden_size)
    returns: (T, B, hidden_size) — hidden state after every step.
    """
    T, B, In = xs.shape
    H = wh_t.shape[1]
    Hp = ((H + 127) // 128) * 128          # lane-dense / MXU-aligned hidden dim
    if batch_block is None:
        batch_block = B
    assert B % batch_block == 0, "batch must divide evenly into batch blocks"

    # Zero-pad the hidden axis (exact: padded columns stay identically zero).
    # In production this padding would be hoisted into parameter preprocessing.
    if Hp != H:
        wx_p = jnp.pad(wx_t, ((0, 0), (0, Hp - H)))
        wh_p = jnp.pad(wh_t, ((0, Hp - H), (0, Hp - H)))
        b_p = jnp.pad(b_fused, ((0, 0), (0, Hp - H)))
        h0_p = jnp.pad(h0, ((0, 0), (0, Hp - H)))
    else:
        wx_p, wh_p, b_p, h0_p = wx_t, wh_t, b_fused, h0

    kernel = functools.partial(_rnn_seq_kernel, nonlinearity=nonlinearity,
                               seq_len=T)
    out = pl.pallas_call(
        kernel,
        out_shape=jax.ShapeDtypeStruct((T, B, Hp), xs.dtype),
        grid=(B // batch_block,),
        in_specs=[
            pl.BlockSpec((T, batch_block, In), lambda b: (0, b, 0)),  # xs block
            pl.BlockSpec((In, Hp), lambda b: (0, 0)),                 # Wx^T resident
            pl.BlockSpec((Hp, Hp), lambda b: (0, 0)),                 # Wh^T resident
            pl.BlockSpec((1, Hp), lambda b: (0, 0)),                  # bias resident
            pl.BlockSpec((batch_block, Hp), lambda b: (b, 0)),        # h0 block
        ],
        out_specs=pl.BlockSpec((T, batch_block, Hp), lambda b: (0, b, 0)),
        scratch_shapes=[pltpu.VMEM((T, batch_block, Hp), jnp.float32)],
        compiler_params=pltpu.CompilerParams(
            dimension_semantics=("parallel",),        # batch rows are independent
            vmem_limit_bytes=32 * 1024 * 1024,        # explicit (v5e default 16MiB)
        ),
    )(xs, wx_p, wh_p, b_p, h0_p)
    return out[:, :, :H]


# ----------------------------------------------------------------------------
# Parameter helpers
# ----------------------------------------------------------------------------
def init_params(key, input_size, hidden_size, dtype=jnp.float32):
    """Matches BasicRNNCell.reset_parameters: uniform(-1/sqrt(H), 1/sqrt(H)).
    Weights kept in the PyTorch (out_features, in_features) convention."""
    std = 1.0 / math.sqrt(hidden_size)
    k1, k2, k3, k4 = jax.random.split(key, 4)
    wx = jax.random.uniform(k1, (hidden_size, input_size), dtype, -std, std)
    wh = jax.random.uniform(k2, (hidden_size, hidden_size), dtype, -std, std)
    bx = jax.random.uniform(k3, (hidden_size,), dtype, -std, std)
    bh = jax.random.uniform(k4, (hidden_size,), dtype, -std, std)
    return wx, wh, bx, bh


def prepare_params(wx, wh, bx, bh, *, compute_dtype=jnp.float32):
    """One-time preprocessing (hoisted out of the per-step path):
    transpose to (in, out), optionally cast weights to bf16 for the MXU,
    pre-sum the biases (kept f32 — all post-matmul elementwise stays f32)."""
    wx_t = wx.T.astype(compute_dtype)                     # (In, H)
    wh_t = wh.T.astype(compute_dtype)                     # (H, H)
    b_fused = (bx + bh).astype(jnp.float32).reshape(1, -1)  # (1, H)
    return wx_t, wh_t, b_fused


if __name__ == "__main__":
    batch = 8
    input_size = 16
    hidden_size = 32
    seq_len = 12
    nonlinearity = "tanh"

    key = jax.random.PRNGKey(0)
    kx, ks, kp = jax.random.split(key, 3)

    wx, wh, bx, bh = init_params(kp, input_size, hidden_size)

    x = jax.random.normal(kx, (batch, input_size), jnp.float32)
    hx = jnp.zeros((batch, hidden_size), jnp.float32)
    xs = jax.random.normal(ks, (seq_len, batch, input_size), jnp.float32)
    h0 = jnp.zeros((batch, hidden_size), jnp.float32)

    # Pure-JAX references
    ref_cell = jnp.tanh(x @ wx.T + bx + hx @ wh.T + bh)

    def scan_step(h, x_t):
        h_new = jnp.tanh(x_t @ wx.T + bx + h @ wh.T + bh)
        return h_new, h_new

    _, ref_seq = jax.lax.scan(scan_step, h0, xs)

    # ---- f32 path (exact match to the PyTorch module) ----
    wx_t, wh_t, b_fused = prepare_params(wx, wh, bx, bh, compute_dtype=jnp.float32)

    hy = basic_rnn_cell(x, hx, wx_t, wh_t, b_fused, nonlinearity=nonlinearity)
    hy = jax.block_until_ready(hy)
    assert hy.shape == (batch, hidden_size)
    assert jnp.allclose(hy, ref_cell, atol=1e-5, rtol=1e-5)

    hs = basic_rnn_sequence(xs, h0, wx_t, wh_t, b_fused, nonlinearity=nonlinearity)
    hs = jax.block_until_ready(hs)
    assert hs.shape == (seq_len, batch, hidden_size)
    assert jnp.allclose(hs, ref_seq, atol=1e-4, rtol=1e-4)

    # ---- bf16-weight path (v6e/v7x MXU-native; f32 accumulation & carry) ----
    wx_b, wh_b, b_b = prepare_params(wx, wh, bx, bh, compute_dtype=jnp.bfloat16)
    hs_bf16 = basic_rnn_sequence(xs, h0, wx_b, wh_b, b_b, nonlinearity=nonlinearity)
    hs_bf16 = jax.block_until_ready(hs_bf16)
    assert jnp.allclose(hs_bf16, ref_seq, atol=5e-2, rtol=5e-2)

    print("KERNEL_OK")
</pallas_src>

<mosaic_0001>
module attributes {stable_mosaic.version = 11 : i64} {
  func.func @_rnn_cell_kernel(%arg0: memref<8x16xf32, #tpu.memory_space<vmem>>, %arg1: memref<8x32xf32, #tpu.memory_space<vmem>>, %arg2: memref<16x32xf32, #tpu.memory_space<vmem>>, %arg3: memref<32x32xf32, #tpu.memory_space<vmem>>, %arg4: memref<1x32xf32, #tpu.memory_space<vmem>>, %arg5: memref<8x32xf32, #tpu.memory_space<vmem>>) attributes {dimension_semantics = [], scalar_prefetch = 0 : i64, scratch_operands = 0 : i64, tpu.core_type = #tpu.core_type<tc>} {
    %c0 = arith.constant 0 : index
    %c0_0 = arith.constant 0 : index
    %0 = vector.load %arg0[%c0, %c0_0] : memref<8x16xf32, #tpu.memory_space<vmem>>, vector<8x16xf32>
    %c0_1 = arith.constant 0 : index
    %c0_2 = arith.constant 0 : index
    %1 = vector.load %arg2[%c0_1, %c0_2] : memref<16x32xf32, #tpu.memory_space<vmem>>, vector<16x32xf32>
    %cst = arith.constant dense<0.000000e+00> : vector<8x32xf32>
    %2 = tpu.matmul %0, %1, %cst {dimension_numbers = #tpu.dot_dimension_numbers<[1], [0], [0], [1], [0, 0, 1, 1], [], []>} : vector<8x16xf32>, vector<16x32xf32>, vector<8x32xf32> -> vector<8x32xf32>
    %c0_3 = arith.constant 0 : index
    %c0_4 = arith.constant 0 : index
    %3 = vector.load %arg1[%c0_3, %c0_4] : memref<8x32xf32, #tpu.memory_space<vmem>>, vector<8x32xf32>
    %c0_5 = arith.constant 0 : index
    %c0_6 = arith.constant 0 : index
    %4 = vector.load %arg3[%c0_5, %c0_6] : memref<32x32xf32, #tpu.memory_space<vmem>>, vector<32x32xf32>
    %cst_7 = arith.constant dense<0.000000e+00> : vector<8x32xf32>
    %5 = tpu.matmul %3, %4, %cst_7 {dimension_numbers = #tpu.dot_dimension_numbers<[1], [0], [0], [1], [0, 0, 1, 1], [], []>} : vector<8x32xf32>, vector<32x32xf32>, vector<8x32xf32> -> vector<8x32xf32>
    %6 = arith.addf %2, %5 : vector<8x32xf32>
    %c0_8 = arith.constant 0 : index
    %c0_9 = arith.constant 0 : index
    %7 = vector.load %arg4[%c0_8, %c0_9] : memref<1x32xf32, #tpu.memory_space<vmem>>, vector<1x32xf32>
    %8 = vector.broadcast %7 : vector<1x32xf32> to vector<8x32xf32>
    %9 = arith.addf %6, %8 : vector<8x32xf32>
    %10 = math.tanh %9 : vector<8x32xf32>
    %c0_10 = arith.constant 0 : index
    %c0_11 = arith.constant 0 : index
    %11 = vector.load %arg5[%c0_10, %c0_11] : memref<8x32xf32, #tpu.memory_space<vmem>>, vector<8x32xf32>
    tpu.vector_store %arg5[%c0_10, %c0_11], %10 {strides = array<i32>} : memref<8x32xf32, #tpu.memory_space<vmem>>, vector<8x32xf32>,
    return
  }
}

</mosaic_0001>

<llo_original>
// kernel: tpu_custom_call.1
$region0: #{tpu_custom_call.1}
  #allocation0 [shape = 'u32[]', space=smem, size = 0x4, offset = 0x4, fixed_abs, tag = 'smem constant byte address 0x4 - core index']
  #allocation1 [shape = 'u32[72,128]{1,0:T(1,128)}', space=vmem, size = 0x9000, scoped, tag = 'internal scratch']
  %s0 = inlined_call_operand.hbm [shape: f32[8,16], index: 0, kind: input, shape index: {}]
  %s1 = inlined_call_operand.hbm [shape: f32[8,32], index: 1, kind: input, shape index: {}]
  %s2 = inlined_call_operand.hbm [shape: f32[16,32], index: 2, kind: input, shape index: {}]
  %s3 = inlined_call_operand.hbm [shape: f32[32,32], index: 3, kind: input, shape index: {}]
  %s4 = inlined_call_operand.vmem [shape: f32[1,32], index: 4, kind: input, shape index: {}]
  %s5 = inlined_call_operand.hbm [shape: f32[8,32], index: 5, kind: output, shape index: {}]
  %s6 = sld [smem:[#allocation0]]
  $region46: #{tpu_custom_call.1} parent=0
    _
  %s8 = ssub.s32 1, %s6
  %s9 = scalar_select 0, %s8, %s6
  $region1: #{tpu_custom_call.1} parent=0
    #allocation2 [shape = 'u8[4096]{0}', space=vmem, size = 0x1000, scoped, tag = 'input window, operand 0, single buffered']
    #allocation3 [shape = 's32[1]{0}', space=sflag, size = 0x4, scoped, tag = 'scoped memory for tpu_custom_call.1']
    #allocation4 [shape = 's32[1]{0}', space=sflag, size = 0x4, scoped, tag = 'scoped memory for tpu_custom_call.1']
    #allocation5 [shape = 'u8[4096]{0}', space=vmem, size = 0x1000, scoped, tag = 'input window, operand 1, single buffered']
    #allocation6 [shape = 's32[1]{0}', space=sflag, size = 0x4, scoped, tag = 'scoped memory for tpu_custom_call.1']
    #allocation7 [shape = 'u8[8192]{0}', space=vmem, size = 0x2000, scoped, tag = 'input window, operand 2, single buffered']
    #allocation8 [shape = 'u8[16384]{0}', space=vmem, size = 0x4000, scoped, tag = 'input window, operand 3, single buffered']
    #allocation9 [shape = 's32[1]{0}', space=sflag, size = 0x4, scoped, tag = 'scoped memory for tpu_custom_call.1']
    #allocation10 [shape = 'u8[4096]{0}', space=vmem, size = 0x1000, scoped, tag = 'output window, operand 0, single buffered']
    %10 = vsyncpa [#allocation3], 0
    %11 = vsyncpa [#allocation6], 0
    %12 = vsyncpa [#allocation9], 0
    %13 = vsyncpa [#allocation4], 0
    // Predicated region
    $region2: #{tpu_custom_call.1} parent=1 // pred_check
      _
    $region3: #{tpu_custom_call.1} parent=1 // pred_check_branch
      %15 = sbr.rel (0) target = $region5
    $region4: #{tpu_custom_call.1} parent=1 // pred_region
      %17 = vsyncadd [#allocation3], 0
      %s19 = sshll.u32 %s0, 4
      %s20 = int_to_ptr.hbm [resolvable:$true] %s19
      %s21 = sshll.u32 [#allocation2], 4
      %s22 = int_to_ptr.vmem [resolvable:$true] %s21
      %24 = dma.hbm_to_vmem [thread:$0]  %s20, 128, %s22, [#allocation3]
    $region5: #{tpu_custom_call.1} parent=1 // pred_fallthru
      _
    // Predicated region
    $region6: #{tpu_custom_call.1} parent=1 // pred_check
      _
    $region7: #{tpu_custom_call.1} parent=1 // pred_check_branch
      %26 = sbr.rel (0) target = $region9
    $region8: #{tpu_custom_call.1} parent=1 // pred_region
      %28 = vsyncadd [#allocation6], 0
      %s30 = sshll.u32 %s1, 4
      %s31 = int_to_ptr.hbm [resolvable:$true] %s30
      %s32 = sshll.u32 [#allocation5], 4
      %s33 = int_to_ptr.vmem [resolvable:$true] %s32
      %35 = dma.hbm_to_vmem [thread:$0]  %s31, 128, %s33, [#allocation6]
    $region9: #{tpu_custom_call.1} parent=1 // pred_fallthru
      _
    // Predicated region
    $region10: #{tpu_custom_call.1} parent=1 // pred_check
      _
    $region11: #{tpu_custom_call.1} parent=1 // pred_check_branch
      %37 = sbr.rel (0) target = $region13
    $region12: #{tpu_custom_call.1} parent=1 // pred_region
      %39 = vsyncadd [#allocation6], 0
      %s40 = sshll.u32 %s2, 4
      %s41 = int_to_ptr.hbm [resolvable:$true] %s40
      %s42 = sshll.u32 [#allocation7], 4
      %s43 = int_to_ptr.vmem [resolvable:$true] %s42
      %48 = dma.hbm_to_vmem [thread:$0]  %s41, 256, %s43, [#allocation6], 128, 128, 8
    $region13: #{tpu_custom_call.1} parent=1 // pred_fallthru
      _
    // Predicated region
    $region14: #{tpu_custom_call.1} parent=1 // pred_check
      _
    $region15: #{tpu_custom_call.1} parent=1 // pred_check_branch
      %50 = sbr.rel (0) target = $region17
    $region16: #{tpu_custom_call.1} parent=1 // pred_region
      %52 = vsyncadd [#allocation9], 0
      %s53 = sshll.u32 %s3, 4
      %s54 = int_to_ptr.hbm [resolvable:$true] %s53
      %s55 = sshll.u32 [#allocation8], 4
      %s56 = int_to_ptr.vmem [resolvable:$true] %s55
      %61 = dma.hbm_to_vmem [thread:$0]  %s54, 512, %s56, [#allocation9], 128, 128, 8
    $region17: #{tpu_custom_call.1} parent=1 // pred_fallthru
      _
    // Predicated region
    $region18: #{tpu_custom_call.1} parent=1 // pred_check
      _
    $region19: #{tpu_custom_call.1} parent=1 // pred_check_branch
      %63 = sbr.rel (0) target = $region21
    $region20: #{tpu_custom_call.1} parent=1 // pred_region
      _
    $region21: #{tpu_custom_call.1} parent=1 // pred_fallthru
      _
    // Predicated region
    $region22: #{tpu_custom_call.1} parent=1 // pred_check
      _
    $region23: #{tpu_custom_call.1} parent=1 // pred_check_branch
      %65 = sbr.rel (0) target = $region25
    $region24: #{tpu_custom_call.1} parent=1 // pred_region
      %67 = dma.done [#allocation3], 128
    $region25: #{tpu_custom_call.1} parent=1 // pred_fallthru
      _
    // Predicated region
    $region26: #{tpu_custom_call.1} parent=1 // pred_check
      _
    $region27: #{tpu_custom_call.1} parent=1 // pred_check_branch
      %69 = sbr.rel (0) target = $region29
    $region28: #{tpu_custom_call.1} parent=1 // pred_region
      %71 = dma.done [#allocation6], 128
    $region29: #{tpu_custom_call.1} parent=1 // pred_fallthru
      _
    // Predicated region
    $region30: #{tpu_custom_call.1} parent=1 // pred_check
      _
    $region31: #{tpu_custom_call.1} parent=1 // pred_check_branch
      %73 = sbr.rel (0) target = $region33
    $region32: #{tpu_custom_call.1} parent=1 // pred_region
      %75 = dma.done [#allocation6], 256
    $region33: #{tpu_custom_call.1} parent=1 // pred_fallthru
      _
    // Predicated region
    $region34: #{tpu_custom_call.1} parent=1 // pred_check
      _
    $region35: #{tpu_custom_call.1} parent=1 // pred_check_branch
      %77 = sbr.rel (0) target = $region37
    $region36: #{tpu_custom_call.1} parent=1 // pred_region
      %79 = dma.done [#allocation9], 512
    $region37: #{tpu_custom_call.1} parent=1 // pred_fallthru
      _
    %v80 = vld [vmem:[#allocation2] sm:$0xff]
    %v81 = vld [vmem:[#allocation7] sm:$0xff]
    %v82 = vld [vmem:[#allocation7 + $0x8] sm:$0xff]
    %v83 = vld [vmem:[#allocation5] sm:$0xff]
    %v84 = vld [vmem:[#allocation8] sm:$0xff]
    %v85 = vld [vmem:[#allocation8 + $0x8] sm:$0xff]
    %v86 = vld [vmem:[#allocation8 + $0x10] sm:$0xff]
    %v87 = vld [vmem:[#allocation8 + $0x18] sm:$0xff]
    %vm88 = vcmask 261120
    %v90 = vsel %vm88, %v83, 0
    %92 = vmatpush.msra.mxu0 0.0
    %93 = vmatpush.msra.mxu0 0.0
    %94 = vmatpush.msra.mxu0 0.0
    %95 = vmatpush.msra.mxu0 0.0
    %96 = vmatpush.msra.mxu0 0.0
    %97 = vmatpush.msra.mxu0 0.0
    %98 = vmatpush.msra.mxu0 0.0
    %99 = vmatpush.msra.mxu0 0.0
    %100 = vmatpush.msra.mxu0 0.0
    %101 = vmatpush.msra.mxu0 0.0
    %102 = vmatpush.msra.mxu0 0.0
    %103 = vmatpush.msra.mxu0 0.0
    %104 = vmatpush.msra.mxu0 %v87
    %105 = vmatpush.msra.mxu0 %v86
    %106 = vmatpush.msra.mxu0 %v85
    %107 = vmatpush.msra.mxu0 %v84
    %108 = vmatmul.f32.gmra.mxu0 %v90
    %v109 = vpop.f32.mrf.mxu0
    %v110 = vadd.f32 0.0, %v109
    %111 = vdwg.mxu0
    %vm112 = vcmask 130048
    %v114 = vsel %vm112, %v80, 0
    %116 = vmatpush.msra.mxu0 0.0
    %117 = vmatpush.msra.mxu0 0.0
    %118 = vmatpush.msra.mxu0 0.0
    %119 = vmatpush.msra.mxu0 0.0
    %120 = vmatpush.msra.mxu0 0.0
    %121 = vmatpush.msra.mxu0 0.0
    %122 = vmatpush.msra.mxu0 0.0
    %123 = vmatpush.msra.mxu0 0.0
    %124 = vmatpush.msra.mxu0 0.0
    %125 = vmatpush.msra.mxu0 0.0
    %126 = vmatpush.msra.mxu0 0.0
    %127 = vmatpush.msra.mxu0 0.0
    %128 = vmatpush.msra.mxu0 0.0
    %129 = vmatpush.msra.mxu0 0.0
    %130 = vmatpush.msra.mxu0 %v82
    %131 = vmatpush.msra.mxu0 %v81
    %132 = vmatmul.f32.gmra.mxu0 %v114
    %v133 = vpop.f32.mrf.mxu0
    %v134 = vadd.f32 %v110, %v133
    %135 = vdwg.mxu0
    %v136 = vld [vmem:[%s4] sm:$0x1]
    %v138 = vperm.slane %v136, 0
    %v140 = vadd.f32 %v134, %v138
    %v141 = vtanh.pop %v140
    %142 = vst.msk [vmem:[#allocation10] sm:$0xff] %vm88, %v141
    // Predicated region
    $region38: #{tpu_custom_call.1} parent=1 // pred_check
      _
    $region39: #{tpu_custom_call.1} parent=1 // pred_check_branch
      %144 = sbr.rel (0) target = $region41
    $region40: #{tpu_custom_call.1} parent=1 // pred_region
      %146 = vsyncadd [#allocation4], 0
      %s148 = sshll.u32 [#allocation10], 4
      %s149 = int_to_ptr.vmem [resolvable:$true] %s148
      %s150 = sshll.u32 %s5, 4
      %s151 = int_to_ptr.hbm [resolvable:$true] %s150
      %153 = dma.vmem_to_hbm [thread:$0]  %s149, 128, %s151, [#allocation4]
    $region41: #{tpu_custom_call.1} parent=1 // pred_fallthru
      _
    // Predicated region
    $region42: #{tpu_custom_call.1} parent=1 // pred_check
      _
    $region43: #{tpu_custom_call.1} parent=1 // pred_check_branch
      %155 = sbr.rel (0) target = $region45
    $region44: #{tpu_custom_call.1} parent=1 // pred_region
      %157 = dma.done [#allocation4], 128
    $region45: #{tpu_custom_call.1} parent=1 // pred_fallthru
      _
    %158 = vsyncpa [#allocation3], 1
    %159 = vsyncpa [#allocation6], 1
    %160 = vsyncpa [#allocation9], 1
    %161 = vsyncpa [#allocation4], 1

</llo_original>
